<compile_context>
chip_gen: v7x
topology: tpu7x:2x2x1
jax: 0.10.0
libtpu: 0.0.40
codegen_flags: <defaults>
</compile_context>

<pallas_src>
import functools

import jax
import jax.numpy as jnp
from jax.experimental import pallas as pl
from jax.experimental.pallas import tpu as pltpu


# --------------------------------------------------------------------------
# Kernel bodies
# --------------------------------------------------------------------------
def _tree_max(parts):
    """Pairwise max reduction over a list of equal-shaped arrays."""
    while len(parts) > 1:
        nxt = [jnp.maximum(parts[i], parts[i + 1])
               for i in range(0, len(parts) - 1, 2)]
        if len(parts) % 2:
            nxt.append(parts[-1])
        parts = nxt
    return parts[0]


def _gumbel_encode(y, enc_ref, *, F, NB, grid_vals):
    """y: (Bt, NB*F) scaled (logits+noise), bin-major (column = bin*F + feat).

    Single-pass softmax over bins using NB static, lane-aligned (Bt, F) slices.
    Accumulates sum(e) and sum(e*grid[n]); only the (Bt, F) result is
    normalized (EUP approx reciprocal).
    """
    ys = [y[:, n * F:(n + 1) * F] for n in range(NB)]
    m = _tree_max(ys)                               # log2(NB) deep, not NB-1
    denom = None
    num = None
    for n in range(NB):
        e = jnp.exp(ys[n] - m)
        denom = e if denom is None else denom + e
        w = e * grid_vals[n]                        # grid values baked as scalars
        num = w if num is None else num + w
    enc_ref[...] = (num * pl.reciprocal(denom, approx=True)).astype(enc_ref.dtype)


def _pants_kernel_extnoise(x_ref, w_ref, b_ref, noise_ref, enc_ref, logits_ref,
                           *, F, NB, inv_temp, grid_vals):
    # x: (Bt, D), w: (D, NB*F) bin-major, b: (1, NB*F), noise: (Bt, NB*F).
    x = x_ref[...].astype(w_ref.dtype)              # bf16 fast path if W is bf16
    z = (jnp.dot(x, w_ref[...], preferred_element_type=jnp.float32)
         + b_ref[...].astype(jnp.float32))
    logits_ref[...] = z.astype(logits_ref.dtype)
    y = (z + noise_ref[...].astype(jnp.float32)) * inv_temp
    _gumbel_encode(y, enc_ref, F=F, NB=NB, grid_vals=grid_vals)


def _pants_kernel_rng(seed_ref, x_ref, w_ref, b_ref, enc_ref, logits_ref,
                      *, F, NB, inv_temp, grid_vals):
    # Production variant: Gumbel noise generated in-kernel -> no HBM noise stream.
    x = x_ref[...].astype(w_ref.dtype)
    z = (jnp.dot(x, w_ref[...], preferred_element_type=jnp.float32)
         + b_ref[...].astype(jnp.float32))
    logits_ref[...] = z.astype(logits_ref.dtype)

    pltpu.prng_seed(seed_ref[0] + pl.program_id(0))
    bits = pltpu.bitcast(pltpu.prng_random_bits(z.shape), jnp.int32)
    m24 = jnp.bitwise_and(bits, 0x00FFFFFF)         # 24 uniform bits, >= 0
    u = (m24.astype(jnp.float32) + 0.5) * (1.0 / 16777216.0)   # u in (0, 1)
    # TODO(synk): on v6e/v7x the log(log(u)) chain could run in bf16 (~2x EUP
    # rate); kept in f32 so the same body lowers on every generation (v5e has
    # no bf16 EUP path).
    gnoise = -jnp.log(-jnp.log(u))                  # standard Gumbel(0, 1)

    y = (z + gnoise) * inv_temp
    _gumbel_encode(y, enc_ref, F=F, NB=NB, grid_vals=grid_vals)


# --------------------------------------------------------------------------
# Wrapper
# --------------------------------------------------------------------------
def _vmem_cap_bytes():
    """Physical VMEM capacity minus headroom; safe fallback off-TPU."""
    try:
        cap = int(pltpu.get_tpu_info().vmem_capacity_bytes)  # 128 MiB v5e/v6e, 64 MiB v7x
        return max(cap - (16 << 20), 32 << 20)
    except Exception:
        return 64 << 20


def _pick_block_b(B, per_row_bytes, resident_bytes, vmem_cap, min_tiles=4):
    """Largest batch tile with >= min_tiles grid steps that fits VMEM (x2 bufs)."""
    budget = int(vmem_cap * 0.8) - resident_bytes - (4 << 20)
    cands = [c for c in (512, 256, 128, 64, 32, 16, 8) if c <= B and B % c == 0]
    for c in cands:                       # keep pipelining / v7x 2-TC split alive
        if B // c >= min_tiles and 2 * c * per_row_bytes <= budget:
            return c
    for c in cands:                       # can't keep min_tiles: just fit VMEM
        if 2 * c * per_row_bytes <= budget:
            return c
    return cands[-1] if cands else B


def torch_params_to_binmajor(W_torch_T, b_torch, out_features, n_bins):
    """W_torch_T: (D, F*NB) == torch_weight.T (flat column = f*NB + n)."""
    D = W_torch_T.shape[0]
    F, NB = out_features, n_bins
    W_bm = W_torch_T.reshape(D, F, NB).transpose(0, 2, 1).reshape(D, NB * F)
    b_bm = b_torch.reshape(F, NB).transpose(1, 0).reshape(NB * F)
    return W_bm, b_bm


def lowrank_pants_forward(x, W_bm, b_bm, grid_vals, *, out_features, n_bins,
                          temperature, noise_bm=None, seed=0, block_b=None,
                          logits_dtype=jnp.float32, torch_logits_layout=False):
    """LowRankPants forward (gumbell branch).

    x:         (B, D) activations.
    W_bm:      (D, n_bins*out_features) weight, pre-transposed & bin-major
               (column = bin*out_features + feature).  Pass bf16 on v6e/v7x
               for the fast MXU path (halves resident VMEM too).
    b_bm:      (n_bins*out_features,) bias, bin-major.
    grid_vals: static Python/NumPy sequence of n_bins bin values (baked in).
    noise_bm:  optional (B, n_bins*out_features) Gumbel noise, bin-major
               (f32 or bf16).  None (default) => in-kernel RNG from `seed`
               (production path: no HBM noise stream).
    logits_dtype: dtype of the logits output stream (bf16 halves HBM traffic
               when downstream tolerates it); `encoded` stays f32.
    torch_logits_layout: if True, return logits as (B, F, NB) like the torch
               module (costs an extra XLA transpose over HBM); default returns
               the free bin-major (B, NB, F) view.

    Returns (encoded (B, F) f32, logits).
    """
    B, D = x.shape
    F, NB = int(out_features), int(n_bins)
    FNB = F * NB
    assert W_bm.shape == (D, FNB), (W_bm.shape, (D, FNB))
    b_bm = jnp.asarray(b_bm).reshape(1, FNB)

    inv_temp = 1.0 / float(temperature)
    grid_tuple = tuple(float(v) for v in grid_vals)   # must be concrete/static
    assert len(grid_tuple) == NB

    has_noise = noise_bm is not None
    x_item = jnp.dtype(x.dtype).itemsize
    w_item = jnp.dtype(W_bm.dtype).itemsize
    b_item = jnp.dtype(b_bm.dtype).itemsize
    l_item = jnp.dtype(logits_dtype).itemsize
    n_item = jnp.dtype(noise_bm.dtype).itemsize if has_noise else 0

    vmem_cap = _vmem_cap_bytes()
    # Pallas double-buffers every BlockSpec input, including the resident W/b.
    # TODO(synk): pipeline_mode=pl.Buffered(1) on w_spec/b_spec would drop the
    # x2 below (matters on v7x's 64 MiB VMEM for large D*F*NB).
    resident = 2 * (D * FNB * w_item + FNB * b_item)
    per_row = D * x_item + F * 4 + FNB * l_item + FNB * n_item
    if block_b is None or B % block_b != 0:
        block_b = _pick_block_b(B, per_row, resident, vmem_cap)
    n_tiles = B // block_b

    required = resident + 2 * block_b * per_row + (4 << 20)
    vmem_limit = int(min(max(required, 16 << 20), vmem_cap))

    imap_tile = lambda i, *_: (i, 0)     # batch-streamed operands / outputs
    imap_rep = lambda i, *_: (0, 0)      # resident operands (W, b)

    x_spec = pl.BlockSpec((block_b, D), imap_tile)
    w_spec = pl.BlockSpec((D, FNB), imap_rep)
    b_spec = pl.BlockSpec((1, FNB), imap_rep)
    enc_spec = pl.BlockSpec((block_b, F), imap_tile)
    log_spec = pl.BlockSpec((block_b, FNB), imap_tile)

    out_shape = (jax.ShapeDtypeStruct((B, F), jnp.float32),
                 jax.ShapeDtypeStruct((B, FNB), logits_dtype))

    cparams = pltpu.CompilerParams(dimension_semantics=("parallel",),
                                   vmem_limit_bytes=vmem_limit)
    bytes_accessed = (x.size * x_item + D * FNB * w_item + FNB * b_item
                      + B * F * 4 + B * FNB * l_item + B * FNB * n_item)
    cost = pl.CostEstimate(flops=2 * B * D * FNB,
                           transcendentals=B * FNB * (1 if has_noise else 3),
                           bytes_accessed=int(bytes_accessed))

    if has_noise:
        # Test / reproducibility path: externally sampled Gumbel noise.
        kernel = functools.partial(_pants_kernel_extnoise, F=F, NB=NB,
                                   inv_temp=inv_temp, grid_vals=grid_tuple)
        gs = pltpu.PrefetchScalarGridSpec(
            num_scalar_prefetch=0, grid=(n_tiles,),
            in_specs=[x_spec, w_spec, b_spec,
                      pl.BlockSpec((block_b, FNB), imap_tile)],
            out_specs=(enc_spec, log_spec))
        enc, logits_flat = pl.pallas_call(
            kernel, out_shape=out_shape, grid_spec=gs,
            compiler_params=cparams, cost_estimate=cost,
        )(x, W_bm, b_bm, noise_bm)
    else:
        # Production default: in-kernel Gumbel RNG (TPU/Mosaic only).
        kernel = functools.partial(_pants_kernel_rng, F=F, NB=NB,
                                   inv_temp=inv_temp, grid_vals=grid_tuple)
        seed_arr = jnp.asarray([int(seed)], dtype=jnp.int32)
        gs = pltpu.PrefetchScalarGridSpec(
            num_scalar_prefetch=1, grid=(n_tiles,),
            in_specs=[x_spec, w_spec, b_spec],
            out_specs=(enc_spec, log_spec))
        enc, logits_flat = pl.pallas_call(
            kernel, out_shape=out_shape, grid_spec=gs,
            compiler_params=cparams, cost_estimate=cost,
        )(seed_arr, x, W_bm, b_bm)

    # Logits come out lane-dense / bin-major; this reshape is free.
    logits = logits_flat.reshape(B, NB, F)
    if torch_logits_layout:
        logits = jnp.transpose(logits, (0, 2, 1))   # torch (B, F, NB) view
    return enc, logits


# --------------------------------------------------------------------------
# Pure-JAX reference (torch layout: flat column index = f*NB + n)
# --------------------------------------------------------------------------
def reference_forward(x, W_torch_T, b_torch, grid_vals, noise, *,
                      out_features, n_bins, temperature):
    z = jnp.dot(x, W_torch_T, precision=jax.lax.Precision.HIGHEST) + b_torch
    logits = z.reshape(x.shape[0], out_features, n_bins)
    p = jax.nn.softmax((logits + noise) / temperature, axis=-1)
    enc = jnp.sum(p * jnp.asarray(grid_vals, jnp.float32), axis=-1)
    return enc, logits


if __name__ == "__main__":
    # Small shapes: in_features=32, out_features=32, n_bins=8, batch=64.
    B, D, F, NB = 64, 32, 32, 8
    temperature = 0.5
    grid_vals = [i / (NB - 1) for i in range(NB)]   # static bin values

    key = jax.random.PRNGKey(0)
    kx, kw, kb, kn = jax.random.split(key, 4)

    # nn.Linear-like init; weight kept pre-transposed to (D, F*NB), torch
    # column order (flat column index = f*NB + n).
    bound = 1.0 / (D ** 0.5)
    W_torch_T = jax.random.uniform(kw, (D, F * NB), jnp.float32,
                                   minval=-bound, maxval=bound)
    b_torch = jax.random.uniform(kb, (F * NB,), jnp.float32,
                                 minval=-bound, maxval=bound)
    x = jax.random.normal(kx, (B, D), jnp.float32)
    noise = jax.random.gumbel(kn, (B, F, NB), jnp.float32)

    # One-time (wrapper-side) reorder to the bin-major / lane-dense layout.
    W_bm, b_bm = torch_params_to_binmajor(W_torch_T, b_torch, F, NB)
    # External noise stream is accepted in bf16 (halves that HBM stream).
    noise_bm = noise.transpose(0, 2, 1).reshape(B, NB * F).astype(jnp.bfloat16)

    # --- Variant A: external (deterministic) noise -> checkable against ref.
    enc, logits_bm = lowrank_pants_forward(
        x, W_bm, b_bm, grid_vals, out_features=F, n_bins=NB,
        temperature=temperature, noise_bm=noise_bm)
    jax.block_until_ready((enc, logits_bm))

    # Reference uses the identical (bf16-rounded) noise values, torch layout.
    noise_used = noise_bm.astype(jnp.float32).reshape(B, NB, F).transpose(0, 2, 1)
    enc_ref, logits_ref = reference_forward(
        x, W_torch_T, b_torch, grid_vals, noise_used,
        out_features=F, n_bins=NB, temperature=temperature)

    assert enc.shape == (B, F)
    assert logits_bm.shape == (B, NB, F)
    logits_torch = jnp.transpose(logits_bm, (0, 2, 1))   # test-side relayout only
    assert jnp.allclose(logits_torch, logits_ref, rtol=2e-3, atol=2e-3)
    # enc tolerance loosened for pl.reciprocal(approx=True) / MXU f32 passes.
    assert jnp.allclose(enc, enc_ref, rtol=1e-2, atol=1e-2)

    # --- Variant B: production default, in-kernel Gumbel RNG (no HBM noise
    # stream).  pltpu.prng_* only lowers through Mosaic, so exercise it only
    # when the backend really is TPU hardware.
    if jax.default_backend() == "tpu":
        enc2, logits2_bm = lowrank_pants_forward(
            x, W_bm, b_bm, grid_vals, out_features=F, n_bins=NB,
            temperature=temperature, seed=1234)
        jax.block_until_ready((enc2, logits2_bm))
        assert jnp.allclose(jnp.transpose(logits2_bm, (0, 2, 1)), logits_ref,
                            rtol=2e-3, atol=2e-3)
        assert bool(jnp.all(jnp.isfinite(enc2)))
        assert bool(jnp.all(enc2 >= -1e-2)) and bool(jnp.all(enc2 <= 1.0 + 1e-2))

    print("KERNEL_OK")
</pallas_src>

<mosaic_0001>
module attributes {stable_mosaic.version = 11 : i64} {
  func.func @_pants_kernel_extnoise(%arg0: i32, %arg1: memref<16x32xf32, #tpu.memory_space<vmem>>, %arg2: memref<32x256xf32, #tpu.memory_space<vmem>>, %arg3: memref<1x256xf32, #tpu.memory_space<vmem>>, %arg4: memref<16x256xbf16, #tpu.memory_space<vmem>>, %arg5: memref<16x32xf32, #tpu.memory_space<vmem>>, %arg6: memref<16x256xf32, #tpu.memory_space<vmem>>) attributes {dimension_semantics = [#tpu.dimension_semantics<parallel>], iteration_bounds = array<i64: 4>, scalar_prefetch = 0 : i64, scratch_operands = 0 : i64, tpu.core_type = #tpu.core_type<tc>, window_params = [{transform_indices = @transform_0, window_bounds = array<i64: 16, 32>}, {pipeline_mode = #tpu.pipeline_mode<synchronous>, transform_indices = @transform_1, window_bounds = array<i64: 32, 256>}, {pipeline_mode = #tpu.pipeline_mode<synchronous>, transform_indices = @transform_2, window_bounds = array<i64: 1, 256>}, {transform_indices = @transform_3, window_bounds = array<i64: 16, 256>}, {transform_indices = @transform_4, window_bounds = array<i64: 16, 32>}, {transform_indices = @transform_5, window_bounds = array<i64: 16, 256>}]} {
    %c0 = arith.constant 0 : index
    %c0_0 = arith.constant 0 : index
    %0 = vector.load %arg1[%c0, %c0_0] : memref<16x32xf32, #tpu.memory_space<vmem>>, vector<16x32xf32>
    %c0_1 = arith.constant 0 : index
    %c0_2 = arith.constant 0 : index
    %1 = vector.load %arg2[%c0_1, %c0_2] : memref<32x256xf32, #tpu.memory_space<vmem>>, vector<32x256xf32>
    %cst = arith.constant dense<0.000000e+00> : vector<16x256xf32>
    %2 = tpu.matmul %0, %1, %cst {dimension_numbers = #tpu.dot_dimension_numbers<[1], [0], [0], [1], [0, 0, 1, 1], [], []>} : vector<16x32xf32>, vector<32x256xf32>, vector<16x256xf32> -> vector<16x256xf32>
    %c0_3 = arith.constant 0 : index
    %c0_4 = arith.constant 0 : index
    %3 = vector.load %arg3[%c0_3, %c0_4] : memref<1x256xf32, #tpu.memory_space<vmem>>, vector<1x256xf32>
    %4 = vector.broadcast %3 : vector<1x256xf32> to vector<16x256xf32>
    %5 = arith.addf %2, %4 : vector<16x256xf32>
    %c0_5 = arith.constant 0 : index
    %c0_6 = arith.constant 0 : index
    %6 = vector.load %arg6[%c0_5, %c0_6] : memref<16x256xf32, #tpu.memory_space<vmem>>, vector<16x256xf32>
    tpu.vector_store %arg6[%c0_5, %c0_6], %5 {strides = array<i32>} : memref<16x256xf32, #tpu.memory_space<vmem>>, vector<16x256xf32>,
    %c0_7 = arith.constant 0 : index
    %c0_8 = arith.constant 0 : index
    %7 = vector.load %arg4[%c0_7, %c0_8] : memref<16x256xbf16, #tpu.memory_space<vmem>>, vector<16x256xbf16>
    %8 = arith.extf %7 : vector<16x256xbf16> to vector<16x256xf32>
    %9 = arith.addf %5, %8 : vector<16x256xf32>
    %cst_9 = arith.constant 2.000000e+00 : f32
    %10 = vector.broadcast %cst_9 : f32 to vector<16x256xf32>
    %11 = arith.mulf %9, %10 : vector<16x256xf32>
    %12 = vector.extract_strided_slice %11 {offsets = [0, 0], sizes = [16, 32], strides = [1, 1]} : vector<16x256xf32> to vector<16x32xf32>
    %13 = vector.extract_strided_slice %11 {offsets = [0, 32], sizes = [16, 32], strides = [1, 1]} : vector<16x256xf32> to vector<16x32xf32>
    %14 = vector.extract_strided_slice %11 {offsets = [0, 64], sizes = [16, 32], strides = [1, 1]} : vector<16x256xf32> to vector<16x32xf32>
    %15 = vector.extract_strided_slice %11 {offsets = [0, 96], sizes = [16, 32], strides = [1, 1]} : vector<16x256xf32> to vector<16x32xf32>
    %16 = vector.extract_strided_slice %11 {offsets = [0, 128], sizes = [16, 32], strides = [1, 1]} : vector<16x256xf32> to vector<16x32xf32>
    %17 = vector.extract_strided_slice %11 {offsets = [0, 160], sizes = [16, 32], strides = [1, 1]} : vector<16x256xf32> to vector<16x32xf32>
    %18 = vector.extract_strided_slice %11 {offsets = [0, 192], sizes = [16, 32], strides = [1, 1]} : vector<16x256xf32> to vector<16x32xf32>
    %19 = vector.extract_strided_slice %11 {offsets = [0, 224], sizes = [16, 32], strides = [1, 1]} : vector<16x256xf32> to vector<16x32xf32>
    %20 = arith.maximumf %12, %13 : vector<16x32xf32>
    %21 = arith.maximumf %14, %15 : vector<16x32xf32>
    %22 = arith.maximumf %16, %17 : vector<16x32xf32>
    %23 = arith.maximumf %18, %19 : vector<16x32xf32>
    %24 = arith.maximumf %20, %21 : vector<16x32xf32>
    %25 = arith.maximumf %22, %23 : vector<16x32xf32>
    %26 = arith.maximumf %24, %25 : vector<16x32xf32>
    %27 = arith.subf %12, %26 : vector<16x32xf32>
    %28 = math.exp %27 : vector<16x32xf32>
    %cst_10 = arith.constant 0.000000e+00 : f32
    %29 = vector.broadcast %cst_10 : f32 to vector<16x32xf32>
    %30 = arith.mulf %28, %29 : vector<16x32xf32>
    %31 = arith.subf %13, %26 : vector<16x32xf32>
    %32 = math.exp %31 : vector<16x32xf32>
    %33 = arith.addf %28, %32 : vector<16x32xf32>
    %cst_11 = arith.constant 0.142857149 : f32
    %34 = vector.broadcast %cst_11 : f32 to vector<16x32xf32>
    %35 = arith.mulf %32, %34 : vector<16x32xf32>
    %36 = arith.addf %30, %35 : vector<16x32xf32>
    %37 = arith.subf %14, %26 : vector<16x32xf32>
    %38 = math.exp %37 : vector<16x32xf32>
    %39 = arith.addf %33, %38 : vector<16x32xf32>
    %cst_12 = arith.constant 0.285714298 : f32
    %40 = vector.broadcast %cst_12 : f32 to vector<16x32xf32>
    %41 = arith.mulf %38, %40 : vector<16x32xf32>
    %42 = arith.addf %36, %41 : vector<16x32xf32>
    %43 = arith.subf %15, %26 : vector<16x32xf32>
    %44 = math.exp %43 : vector<16x32xf32>
    %45 = arith.addf %39, %44 : vector<16x32xf32>
    %cst_13 = arith.constant 0.428571433 : f32
    %46 = vector.broadcast %cst_13 : f32 to vector<16x32xf32>
    %47 = arith.mulf %44, %46 : vector<16x32xf32>
    %48 = arith.addf %42, %47 : vector<16x32xf32>
    %49 = arith.subf %16, %26 : vector<16x32xf32>
    %50 = math.exp %49 : vector<16x32xf32>
    %51 = arith.addf %45, %50 : vector<16x32xf32>
    %cst_14 = arith.constant 0.571428597 : f32
    %52 = vector.broadcast %cst_14 : f32 to vector<16x32xf32>
    %53 = arith.mulf %50, %52 : vector<16x32xf32>
    %54 = arith.addf %48, %53 : vector<16x32xf32>
    %55 = arith.subf %17, %26 : vector<16x32xf32>
    %56 = math.exp %55 : vector<16x32xf32>
    %57 = arith.addf %51, %56 : vector<16x32xf32>
    %cst_15 = arith.constant 0.714285731 : f32
    %58 = vector.broadcast %cst_15 : f32 to vector<16x32xf32>
    %59 = arith.mulf %56, %58 : vector<16x32xf32>
    %60 = arith.addf %54, %59 : vector<16x32xf32>
    %61 = arith.subf %18, %26 : vector<16x32xf32>
    %62 = math.exp %61 : vector<16x32xf32>
    %63 = arith.addf %57, %62 : vector<16x32xf32>
    %cst_16 = arith.constant 0.857142865 : f32
    %64 = vector.broadcast %cst_16 : f32 to vector<16x32xf32>
    %65 = arith.mulf %62, %64 : vector<16x32xf32>
    %66 = arith.addf %60, %65 : vector<16x32xf32>
    %67 = arith.subf %19, %26 : vector<16x32xf32>
    %68 = math.exp %67 : vector<16x32xf32>
    %69 = arith.addf %63, %68 : vector<16x32xf32>
    %cst_17 = arith.constant 1.000000e+00 : f32
    %70 = vector.broadcast %cst_17 : f32 to vector<16x32xf32>
    %71 = arith.mulf %68, %70 : vector<16x32xf32>
    %72 = arith.addf %66, %71 : vector<16x32xf32>
    %73 = tpu.reciprocal %69 {approx = true} : vector<16x32xf32> -> vector<16x32xf32>
    %74 = arith.mulf %72, %73 : vector<16x32xf32>
    %c0_18 = arith.constant 0 : index
    %c0_19 = arith.constant 0 : index
    %75 = vector.load %arg5[%c0_18, %c0_19] : memref<16x32xf32, #tpu.memory_space<vmem>>, vector<16x32xf32>
    tpu.vector_store %arg5[%c0_18, %c0_19], %74 {strides = array<i32>} : memref<16x32xf32, #tpu.memory_space<vmem>>, vector<16x32xf32>,
    return
  }
  func.func @transform_0(%arg0: i32) -> (i32, i32) {
    %c0_i32 = arith.constant 0 : i32
    %c0_i32_0 = arith.constant 0 : i32
    return %arg0, %c0_i32 : i32, i32
  }
  func.func @transform_1(%arg0: i32) -> (i32, i32) {
    %c0_i32 = arith.constant 0 : i32
    %c0_i32_0 = arith.constant 0 : i32
    %c0_i32_1 = arith.constant 0 : i32
    return %c0_i32, %c0_i32_0 : i32, i32
  }
  func.func @transform_2(%arg0: i32) -> (i32, i32) {
    %c0_i32 = arith.constant 0 : i32
    %c0_i32_0 = arith.constant 0 : i32
    %c0_i32_1 = arith.constant 0 : i32
    return %c0_i32, %c0_i32_0 : i32, i32
  }
  func.func @transform_3(%arg0: i32) -> (i32, i32) {
    %c0_i32 = arith.constant 0 : i32
    %c0_i32_0 = arith.constant 0 : i32
    return %arg0, %c0_i32 : i32, i32
  }
  func.func @transform_4(%arg0: i32) -> (i32, i32) {
    %c0_i32 = arith.constant 0 : i32
    %c0_i32_0 = arith.constant 0 : i32
    return %arg0, %c0_i32 : i32, i32
  }
  func.func @transform_5(%arg0: i32) -> (i32, i32) {
    %c0_i32 = arith.constant 0 : i32
    %c0_i32_0 = arith.constant 0 : i32
    return %arg0, %c0_i32 : i32, i32
  }
}

</mosaic_0001>

<llo_original>
// kernel: tpu_custom_call.1
$region0: #{tpu_custom_call.1}
  #allocation0 [shape = 'u32[]', space=smem, size = 0x4, offset = 0x4, fixed_abs, tag = 'smem constant byte address 0x4 - core index']
  #allocation1 [shape = 'u32[144,128]{1,0:T(1,128)}', space=vmem, size = 0x12000, scoped, tag = 'internal scratch']
  %s0 = inlined_call_operand.vmem [shape: f32[64,32], index: 0, kind: input, shape index: {}]
  %s1 = inlined_call_operand.vmem [shape: f32[32,256], index: 1, kind: input, shape index: {}]
  %s2 = inlined_call_operand.vmem [shape: f32[1,256], index: 2, kind: input, shape index: {}]
  %s3 = inlined_call_operand.hbm [shape: bf16[64,256], index: 3, kind: input, shape index: {}]
  %s4 = inlined_call_operand.vmem [shape: f32[64,32], index: 4, kind: output, shape index: {0}]
  %s5 = inlined_call_operand.hbm [shape: f32[64,256], index: 5, kind: output, shape index: {1}]
  %6 = xla_tuple %s4, %s5
  %s7 = sld [smem:[#allocation0]]
  $region61: #{tpu_custom_call.1} parent=0
    _
  %s9 = ssub.s32 1, %s7
  %s10 = scalar_select 0, %s9, %s7
  $region1: #{tpu_custom_call.1} parent=0
    #allocation2 [shape = 'u8[16384]{0}', space=vmem, size = 0x4000, scoped, tag = 'input window, operand 3']
    #allocation3 [shape = 's32[2]{0}', space=sflag, size = 0x8, scoped, tag = 'scoped memory for tpu_custom_call.1']
    #allocation4 [shape = 's32[2]{0}', space=sflag, size = 0x8, scoped, tag = 'scoped memory for tpu_custom_call.1']
    #allocation5 [shape = 'u8[32768]{0}', space=vmem, size = 0x8000, scoped, tag = 'output window, operand 1']
    %11 = vsyncpa [#allocation3], 0
    %s12 = scalar_lea.sflag [#allocation3], 1
    %13 = vsyncpa %s12, 0
    %14 = vsyncpa [#allocation4], 0
    %s15 = scalar_lea.sflag [#allocation4], 1
    %16 = vsyncpa %s15, 0
    loop: start=0, step=1, limit=6
    $region2: #{tpu_custom_call.1} parent=1 // loop_pre_header
      _
    $region3: #{tpu_custom_call.1} parent=1 // loop_header
      %s18 = sphi 0, %s22
      %p19 = scmp.ge.s32.totalorder %s18, 6
      %s28 = sphi 0, %s30
      %s31 = sphi 0, %s28
      %s32 = sphi 0, %s31
      %s48 = sphi 0, %s32
      %s52 = sphi 0, %s52
      %s54 = sphi 0, %s52
      %s55 = sphi 0, %s54
      %s69 = sphi 0, %s55
      %s73 = sphi 0, %s73
      %s75 = sphi 0, %s73
      %s76 = sphi 0, %s75
      %s90 = sphi 0, %s76
      %s96 = sphi 0, %s98
      %s99 = sphi 0, %s96
      %s100 = sphi 0, %s99
      %s116 = sphi 0, %s100
      %s122 = sphi 0, %s124
      %s125 = sphi 0, %s122
      %s126 = sphi 0, %s125
      %s142 = sphi 0, %s126
      %s148 = sphi 0, %s150
      %s151 = sphi 0, %s148
      %s152 = sphi 0, %s151
      %s168 = sphi 0, %s152
    $region4: #{tpu_custom_call.1} parent=1 // loop_header_branch
      %21 = sbr.rel (%p19) target = $region8
    $region5: #{tpu_custom_call.1} parent=1 // loop_body
      %s23 = ssub.s32 %s18, 1
      %s24 = ssub.s32 %s18, 2
      %s25 = sadd.s32 %s18, 1
      %s26 = ssub.s32 %s18, %s25
      %p27 = scmp.eq.s32.totalorder %s26, 0
      %s29 = sadd.s32 %s28, 1
      %s30 = scalar_select %p27, %s28, %s29
      %p33 = pneg %p27
      %p34 = scmp.eq.s32.totalorder %s18, 3
      %p35 = por %p33, %p34
      %p36 = scmp.ne.s32.totalorder %s28, %s31
      %p37 = scmp.eq.s32.totalorder %s18, 0
      %p38 = por %p36, %p37
      %p39 = scmp.ne.s32.totalorder %s28, %s31
      %p40 = scmp.eq.s32.totalorder %s23, 3
      %p41 = por %p39, %p40
      %p42 = scmp.ne.s32.totalorder %s31, %s32
      %p43 = scmp.eq.s32.totalorder %s23, 0
      %p44 = por %p42, %p43
      %p45 = scmp.ne.s32.totalorder %s31, %s32
      %p46 = scmp.eq.s32.totalorder %s24, 3
      %p47 = por %p45, %p46
      %p49 = scmp.ne.s32.totalorder %s32, %s48
      %p50 = scmp.eq.s32.totalorder %s24, 0
      %p51 = por %p49, %p50
      %s53 = sadd.s32 %s52, 1
      %p56 = scmp.eq.s32.totalorder %s18, 3
      %p57 = scmp.ne.s32.totalorder %s52, %s54
      %p58 = scmp.eq.s32.totalorder %s18, 0
      %p59 = por %p57, %p58
      %p60 = scmp.ne.s32.totalorder %s52, %s54
      %p61 = scmp.eq.s32.totalorder %s23, 3
      %p62 = por %p60, %p61
      %p63 = scmp.ne.s32.totalorder %s54, %s55
      %p64 = scmp.eq.s32.totalorder %s23, 0
      %p65 = por %p63, %p64
      %p66 = scmp.ne.s32.totalorder %s54, %s55
      %p67 = scmp.eq.s32.totalorder %s24, 3
      %p68 = por %p66, %p67
      %p70 = scmp.ne.s32.totalorder %s55, %s69
      %p71 = scmp.eq.s32.totalorder %s24, 0
      %p72 = por %p70, %p71
      %s74 = sadd.s32 %s73, 1
      %p77 = scmp.eq.s32.totalorder %s18, 3
      %p78 = scmp.ne.s32.totalorder %s73, %s75
      %p79 = scmp.eq.s32.totalorder %s18, 0
      %p80 = por %p78, %p79
      %p81 = scmp.ne.s32.totalorder %s73, %s75
      %p82 = scmp.eq.s32.totalorder %s23, 3
      %p83 = por %p81, %p82
      %p84 = scmp.ne.s32.totalorder %s75, %s76
      %p85 = scmp.eq.s32.totalorder %s23, 0
      %p86 = por %p84, %p85
      %p87 = scmp.ne.s32.totalorder %s75, %s76
      %p88 = scmp.eq.s32.totalorder %s24, 3
      %p89 = por %p87, %p88
      %p91 = scmp.ne.s32.totalorder %s76, %s90
      %p92 = scmp.eq.s32.totalorder %s24, 0
      %p93 = por %p91, %p92
      %s94 = ssub.s32 %s18, %s25
      %p95 = scmp.eq.s32.totalorder %s94, 0
      %s97 = sadd.s32 %s96, 1
      %s98 = scalar_select %p95, %s96, %s97
      %p101 = pneg %p95
      %p102 = scmp.eq.s32.totalorder %s18, 3
      %p103 = por %p101, %p102
      %p104 = scmp.ne.s32.totalorder %s96, %s99
      %p105 = scmp.eq.s32.totalorder %s18, 0
      %p106 = por %p104, %p105
      %p107 = scmp.ne.s32.totalorder %s96, %s99
      %p108 = scmp.eq.s32.totalorder %s23, 3
      %p109 = por %p107, %p108
      %p110 = scmp.ne.s32.totalorder %s99, %s100
      %p111 = scmp.eq.s32.totalorder %s23, 0
      %p112 = por %p110, %p111
      %p113 = scmp.ne.s32.totalorder %s99, %s100
      %p114 = scmp.eq.s32.totalorder %s24, 3
      %p115 = por %p113, %p114
      %p117 = scmp.ne.s32.totalorder %s100, %s116
      %p118 = scmp.eq.s32.totalorder %s24, 0
      %p119 = por %p117, %p118
      %s120 = ssub.s32 %s18, %s25
      %p121 = scmp.eq.s32.totalorder %s120, 0
      %s123 = sadd.s32 %s122, 1
      %s124 = scalar_select %p121, %s122, %s123
      %p127 = pneg %p121
      %p128 = scmp.eq.s32.totalorder %s18, 3
      %p129 = por %p127, %p128
      %p130 = scmp.ne.s32.totalorder %s122, %s125
      %p131 = scmp.eq.s32.totalorder %s18, 0
      %p132 = por %p130, %p131
      %p133 = scmp.ne.s32.totalorder %s122, %s125
      %p134 = scmp.eq.s32.totalorder %s23, 3
      %p135 = por %p133, %p134
      %p136 = scmp.ne.s32.totalorder %s125, %s126
      %p137 = scmp.eq.s32.totalorder %s23, 0
      %p138 = por %p136, %p137
      %p139 = scmp.ne.s32.totalorder %s125, %s126
      %p140 = scmp.eq.s32.totalorder %s24, 3
      %p141 = por %p139, %p140
      %p143 = scmp.ne.s32.totalorder %s126, %s142
      %p144 = scmp.eq.s32.totalorder %s24, 0
      %p145 = por %p143, %p144
      %s146 = ssub.s32 %s18, %s25
      %p147 = scmp.eq.s32.totalorder %s146, 0
      %s149 = sadd.s32 %s148, 1
      %s150 = scalar_select %p147, %s148, %s149
      %p153 = pneg %p147
      %p154 = scmp.eq.s32.totalorder %s18, 3
      %p155 = por %p153, %p154
      %p156 = scmp.ne.s32.totalorder %s148, %s151
      %p157 = scmp.eq.s32.totalorder %s18, 0
      %p158 = por %p156, %p157
      %p159 = scmp.ne.s32.totalorder %s148, %s151
      %p160 = scmp.eq.s32.totalorder %s23, 3
      %p161 = por %p159, %p160
      %p162 = scmp.ne.s32.totalorder %s151, %s152
      %p163 = scmp.eq.s32.totalorder %s23, 0
      %p164 = por %p162, %p163
      %p165 = scmp.ne.s32.totalorder %s151, %s152
      %p166 = scmp.eq.s32.totalorder %s24, 3
      %p167 = por %p165, %p166
      %p169 = scmp.ne.s32.totalorder %s152, %s168
      %p170 = scmp.eq.s32.totalorder %s24, 0
      %p171 = por %p169, %p170
      %p172 = scmp.le.s32.totalorder 1, %s18
      %p173 = scmp.lt.s32.totalorder %s18, 5
      %p174 = pnand %p172, %p173
      %p175 = pneg %p174
      // Predicated region
      $region9: #{tpu_custom_call.1} parent=5 // pred_check
        _
      $region10: #{tpu_custom_call.1} parent=5 // pred_check_branch
        %177 = sbr.rel (%p174) target = $region12
      $region11: #{tpu_custom_call.1} parent=5 // pred_region
        %s178 = ssub.s32 %s18, 1
        // Predicated region
        $region13: #{tpu_custom_call.1} parent=11 // pred_check
          %p179 = pneg %p65
        $region14: #{tpu_custom_call.1} parent=11 // pred_check_branch
          %181 = sbr.rel (%p179) target = $region16
        $region15: #{tpu_custom_call.1} parent=11 // pred_region
          _
        $region16: #{tpu_custom_call.1} parent=11 // pred_fallthru
          _
        // Predicated region
        $region17: #{tpu_custom_call.1} parent=11 // pred_check
          %p182 = pneg %p86
        $region18: #{tpu_custom_call.1} parent=11 // pred_check_branch
          %184 = sbr.rel (%p182) target = $region20
        $region19: #{tpu_custom_call.1} parent=11 // pred_region
          _
        $region20: #{tpu_custom_call.1} parent=11 // pred_fallthru
          _
      $region12: #{tpu_custom_call.1} parent=5 // pred_fallthru
        _
      %p185 = scmp.lt.s32.totalorder %s18, 4
      // Predicated region
      $region21: #{tpu_custom_call.1} parent=5 // pred_check
        %p186 = pneg %p185
      $region22: #{tpu_custom_call.1} parent=5 // pred_check_branch
        %188 = sbr.rel (%p186) target = $region24
      $region23: #{tpu_custom_call.1} parent=5 // pred_region
        // Predicated region
        $region25: #{tpu_custom_call.1} parent=23 // pred_check
          %p189 = pneg %p38
        $region26: #{tpu_custom_call.1} parent=23 // pred_check_branch
          %191 = sbr.rel (%p189) target = $region28
        $region27: #{tpu_custom_call.1} parent=23 // pred_region
          %s192 = smul.u32 2, %s18
          %p193 = scmp.lt.s32.totalorder %s192, 7
          %s194 = scalar_select %p193, %s192, 7
          %s195 = smul.addr %s194, 8
          %s196 = scalar_lea.vmem %s0, %s195
          %s197 = smul.u32 2, %s18
        $region28: #{tpu_custom_call.1} parent=23 // pred_fallthru
          _
        // Predicated region
        $region29: #{tpu_custom_call.1} parent=23 // pred_check
          %p198 = pneg %p106
        $region30: #{tpu_custom_call.1} parent=23 // pred_check_branch
          %200 = sbr.rel (%p198) target = $region32
        $region31: #{tpu_custom_call.1} parent=23 // pred_region
          %s201 = sand.u32 %s96, 1
          %s202 = scalar_lea.sflag [#allocation3], %s201
          %s203 = sand.u32 %s96, 1
          %s204 = smul.addr %s203, 16
          %s205 = scalar_lea.vmem [#allocation2], %s204
          %s206 = smul.u32 2, %s18
          %s208 = ssub.s32 256, 256
          %209 = vsyncadd %s202, %s208
          %s210 = smul.addr %s206, 2
          %s211 = smul.addr %s210, 64
          %s212 = scalar_lea.hbm %s3, %s211
          %s213 = sshll.u32 %s205, 4
          %s214 = int_to_ptr.vmem [resolvable:$true] %s213
          %219 = dma.hbm_to_vmem [thread:$0]  %s212, 256, %s214, %s202, 128, 128, 8
        $region32: #{tpu_custom_call.1} parent=23 // pred_fallthru
          _
      $region24: #{tpu_custom_call.1} parent=5 // pred_fallthru
        _
      %p220 = scmp.le.s32.totalorder 1, %s18
      %p221 = scmp.lt.s32.totalorder %s18, 5
      %p222 = pnand %p220, %p221
      %p223 = pneg %p222
      // Predicated region
      $region33: #{tpu_custom_call.1} parent=5 // pred_check
        _
      $region34: #{tpu_custom_call.1} parent=5 // pred_check_branch
        %225 = sbr.rel (%p222) target = $region36
      $region35: #{tpu_custom_call.1} parent=5 // pred_region
        %s226 = ssub.s32 %s18, 1
        %s227 = sand.u32 %s99, 1
        %s228 = scalar_lea.sflag [#allocation3], %s227
        %s229 = sand.u32 %s99, 1
        %s230 = smul.addr %s229, 16
        %s231 = scalar_lea.vmem [#allocation2], %s230
        // Predicated region
        $region37: #{tpu_custom_call.1} parent=35 // pred_check
          %p232 = pneg %p112
        $region38: #{tpu_custom_call.1} parent=35 // pred_check_branch
          %234 = sbr.rel (%p232) target = $region40
        $region39: #{tpu_custom_call.1} parent=35 // pred_region
          %235 = dma.done %s228, 256
        $region40: #{tpu_custom_call.1} parent=35 // pred_fallthru
          _
        %s236 = smul.u32 2, %s23
        %p237 = scmp.lt.s32.totalorder %s236, 7
        %s238 = scalar_select %p237, %s236, 7
        %s239 = smul.addr %s238, 8
        %s240 = scalar_lea.vmem %s0, %s239
        %p241 = pneg %p44
        %p242 = pneg %p41
        %p243 = pneg %p65
        %p244 = pneg %p62
        %p245 = pneg %p86
        %p246 = pneg %p83
        %s247 = sand.u32 %s99, 1
        %s248 = scalar_lea.sflag [#allocation3], %s247
        %s249 = sand.u32 %s99, 1
        %s250 = smul.addr %s249, 16
        %s251 = scalar_lea.vmem [#allocation2], %s250
        %p252 = pneg %p112
        %p253 = pneg %p109
        %p254 = pneg %p138
        %p255 = pneg %p135
        %s256 = smul.u32 2, %s23
        %p257 = scmp.lt.s32.totalorder %s256, 7
        %s258 = scalar_select %p257, %s256, 7
        %s259 = smul.addr %s258, 8
        %s260 = scalar_lea.vmem %s4, %s259
        %p261 = pneg %p164
        %p262 = pneg %p161
        %s263 = sand.u32 %s151, 1
        %s264 = scalar_lea.sflag [#allocation4], %s263
        %s265 = sand.u32 %s151, 1
        %s266 = smul.addr %s265, 32
        %s267 = scalar_lea.vmem [#allocation5], %s266
        %s268 = smul.u32 2, %s23
        %p269 = scmp.lt.s32.totalorder %s268, 7
        %s270 = scalar_select %p269, %s268, 7
        %s271 = smul.addr %s270, 8
        %s272 = scalar_lea.vmem %s0, %s271
        %s273 = smul.u32 2, %s23
        %s274 = smul.u32 2, %s23
        %s275 = smul.u32 2, %s23
        %p276 = scmp.lt.s32.totalorder %s275, 7
        %s277 = scalar_select %p276, %s275, 7
        %s278 = smul.addr %s277, 8
        %s279 = scalar_lea.vmem %s4, %s278
        %s280 = smul.u32 2, %s23
        %s281 = smul.u32 2, %s23
        %v282 = vld [vmem:[%s272] sm:$0xff]
        %v283 = vld [vmem:[%s272 + $0x8] sm:$0xff]
        %v284 = vld [vmem:[%s1] sm:$0xff]
        %v285 = vld [vmem:[%s1 + $0x8] sm:$0xff]
        %v286 = vld [vmem:[%s1 + $0x10] sm:$0xff]
        %v287 = vld [vmem:[%s1 + $0x18] sm:$0xff]
        %v288 = vld [vmem:[%s1 + $0x20] sm:$0xff]
        %v289 = vld [vmem:[%s1 + $0x28] sm:$0xff]
        %v290 = vld [vmem:[%s1 + $0x30] sm:$0xff]
        %v291 = vld [vmem:[%s1 + $0x38] sm:$0xff]
        %v292 = vld [vmem:[%s2] sm:$0x3]
        %v294 = vlaneseq
        %v295 = vshrl.u32 %v294, 7
        %v296 = vsub.s32 0, %v295
        %v297 = vrot.slane %v292, %v296
        %v298 = vlaneseq
        %v299 = vshrl.u32 %v298, 7
        %v300 = vsub.s32 1, %v299
        %v301 = vrot.slane %v292, %v300
        %vm304 = vcmask 261120
        %v306 = vsel %vm304, %v282, 0
        %v309 = vsel %vm304, %v283, 0
        %311 = vmatprep.subr.mxu0 %v285
        %312 = vmatpush1.msra.mxu0 %v284
        %313 = vmatprep.subr.mxu0 %v287
        %314 = vmatpush1.msra.mxu0 %v286
        %315 = vmatprep.subr.mxu0 %v289
        %316 = vmatpush1.msra.mxu0 %v288
        %317 = vmatprep.subr.mxu0 %v291
        %318 = vmatpush1.msra.mxu0 %v290
        %319 = vmatprep.subr.mxu0 0.0
        %320 = vmatpush1.msra.mxu0 0.0
        %321 = vmatprep.subr.mxu0 0.0
        %322 = vmatpush1.msra.mxu0 0.0
        %323 = vmatprep.subr.mxu0 0.0
        %324 = vmatpush1.msra.mxu0 0.0
        %325 = vmatprep.subr.mxu0 0.0
        %326 = vmatpush1.msra.mxu0 0.0
        %327 = vmatprep.subr.mxu0 0.0
        %328 = vmatpush1.msra.mxu0 0.0
        %329 = vmatprep.subr.mxu0 0.0
        %330 = vmatpush1.msra.mxu0 0.0
        %331 = vmatprep.subr.mxu0 0.0
        %332 = vmatpush1.msra.mxu0 0.0
        %333 = vmatprep.subr.mxu0 0.0
        %334 = vmatpush1.msra.mxu0 0.0
        %335 = vmatprep.subr.mxu0 0.0
        %336 = vmatpush1.msra.mxu0 0.0
        %337 = vmatprep.subr.mxu0 0.0
        %338 = vmatpush1.msra.mxu0 0.0
        %339 = vmatprep.subr.mxu0 0.0
        %340 = vmatpush1.msra.mxu0 0.0
        %341 = vmatprep.subr.mxu0 0.0
        %342 = vmatpush1.msra.mxu0 0.0
        %343 = vmatprep.subr.mxu0 0.0
        %344 = vmatpush1.msra.mxu0 0.0
        %345 = vmatprep.subr.mxu0 0.0
        %346 = vmatpush1.msra.mxu0 0.0
        %347 = vmatprep.subr.mxu0 0.0
        %348 = vmatpush1.msra.mxu0 0.0
        %349 = vmatprep.subr.mxu0 0.0
        %350 = vmatpush1.msra.mxu0 0.0
        %351 = vmatprep.subr.mxu0 0.0
        %352 = vmatpush1.msra.mxu0 0.0
        %353 = vmatprep.subr.mxu0 0.0
        %354 = vmatpush1.msra.mxu0 0.0
        %355 = vmatprep.subr.mxu0 0.0
        %356 = vmatpush1.msra.mxu0 0.0
        %357 = vmatprep.subr.mxu0 0.0
        %358 = vmatpush1.msra.mxu0 0.0
        %359 = vmatprep.subr.mxu0 0.0
        %360 = vmatpush1.msra.mxu0 0.0
        %361 = vmatprep.subr.mxu0 0.0
        %362 = vmatpush1.msra.mxu0 0.0
        %363 = vmatprep.subr.mxu0 0.0
        %364 = vmatpush1.msra.mxu0 0.0
        %365 = vmatprep.subr.mxu0 0.0
        %366 = vmatpush1.msra.mxu0 0.0
        %367 = vmatprep.subr.mxu0 0.0
        %368 = vmatpush1.msra.mxu0 0.0
        %369 = vmatprep.subr.mxu0 0.0
        %370 = vmatpush1.msra.mxu0 0.0
        %371 = vmatprep.subr.mxu0 0.0
        %372 = vmatpush1.msra.mxu0 0.0
        %373 = vmatprep.subr.mxu0 0.0
        %374 = vmatpush1.msra.mxu0 0.0
        %375 = vmatprep.mubr.f32.mxu0 0.0
        %376 = vmatmul.mubr.f32.gmra.mrb[0].mxu0 %v306
        %v377 = vpop.f32.mrb[0].mxu0
        %v378 = vadd.f32 %v297, %v377
        %v379 = vpop.f32.mrb[0].mxu0
        %v380 = vadd.f32 %v301, %v379
        %381 = vmatprep.mubr.f32.mxu0 0.0
        %382 = vmatmul.mubr.f32.gmra.mrb[0].mxu0 %v309
        %v383 = vpop.f32.mrb[0].mxu0
        %v384 = vadd.f32 %v297, %v383
        %v385 = vpop.f32.mrb[0].mxu0
        %v386 = vadd.f32 %v301, %v385
        %387 = vdwg.mxu0
        %388 = vst [vmem:[%s267] sm:$0xff] %v378
        %389 = vst [vmem:[%s267 + $0x8] sm:$0xff] %v380
        %390 = vst [vmem:[%s267 + $0x10] sm:$0xff] %v384
        %391 = vst [vmem:[%s267 + $0x18] sm:$0xff] %v386
        %v392 = vld [vmem:[%s231] sm:$0xff]
        %v393 = vld [vmem:[%s231 + $0x8] sm:$0xff]
        %v394 = vunpack.c.l.bf16 %v392
        %v395 = vunpack.c.h.bf16 %v392
        %v396 = vunpack.c.l.bf16 %v393
        %v397 = vunpack.c.h.bf16 %v393
        %v398 = vadd.f32 %v378, %v394
        %v399 = vadd.f32 %v380, %v395
        %v400 = vadd.f32 %v384, %v396
        %v401 = vadd.f32 %v386, %v397
        %v402 = vmul.f32 %v398, 2.0
        %v403 = vmul.f32 %v399, 2.0
        %v404 = vmul.f32 %v400, 2.0
        %v405 = vmul.f32 %v401, 2.0
        %408 = vrot.lane.b32.xlu0 %v402, 96
        %v409 = vpop.permute.xlu0 %408
        %410 = vrot.lane.b32.xlu0 %v404, 96
        %v411 = vpop.permute.xlu0 %410
        %v414 = vmax.f32 %v402, %v409
        %v415 = vmax.f32 %v404, %v411
        %418 = vrot.lane.b32.xlu0 %v403, 96
        %v419 = vpop.permute.xlu0 %418
        %420 = vrot.lane.b32.xlu0 %v405, 96
        %v421 = vpop.permute.xlu0 %420
        %v424 = vmax.f32 %v403, %v419
        %v425 = vmax.f32 %v405, %v421
        %428 = vrot.lane.b32.xlu0 %v414, 64
        %v429 = vpop.permute.xlu0 %428
        %430 = vrot.lane.b32.xlu0 %v415, 64
        %v431 = vpop.permute.xlu0 %430
        %v434 = vmax.f32 %v414, %v429
        %v435 = vmax.f32 %v415, %v431
        %438 = vrot.lane.b32.xlu0 %v424, 64
        %v439 = vpop.permute.xlu0 %438
        %440 = vrot.lane.b32.xlu0 %v425, 64
        %v441 = vpop.permute.xlu0 %440
        %v444 = vmax.f32 %v424, %v439
        %v445 = vmax.f32 %v425, %v441
        %v446 = vmax.f32 %v434, %v444
        %v447 = vmax.f32 %v435, %v445
        %v448 = vsub.f32 %v402, %v446
        %v449 = vsub.f32 %v404, %v447
        %v450 = vmul.f32 %v448, 1.442695
        %v451 = vpow.pop %v450
        %v452 = vmul.f32 %v449, 1.442695
        %v453 = vpow.pop %v452
        %v454 = vmul.f32 %v451, 0.0
        %v455 = vmul.f32 %v453, 0.0
        %458 = vrot.lane.b32.xlu0 %v446, 32
        %v459 = vpop.permute.xlu0 %458
        %460 = vrot.lane.b32.xlu0 %v447, 32
        %v461 = vpop.permute.xlu0 %460
        %v464 = vsub.f32 %v402, %v459
        %v465 = vsub.f32 %v404, %v461
        %v466 = vmul.f32 %v464, 1.442695
        %v467 = vpow.pop %v466
        %v468 = vmul.f32 %v465, 1.442695
        %v469 = vpow.pop %v468
        %472 = vrot.lane.b32.xlu0 %v467, 96
        %v473 = vpop.permute.xlu0 %472
        %474 = vrot.lane.b32.xlu0 %v469, 96
        %v475 = vpop.permute.xlu0 %474
        %v478 = vadd.f32 %v451, %v473
        %v479 = vadd.f32 %v453, %v475
        %v480 = vmul.f32 %v467, 0.14285715
        %v481 = vmul.f32 %v469, 0.14285715
        %484 = vrot.lane.b32.xlu0 %v480, 96
        %v485 = vpop.permute.xlu0 %484
        %486 = vrot.lane.b32.xlu0 %v481, 96
        %v487 = vpop.permute.xlu0 %486
        %v490 = vadd.f32 %v454, %v485
        %v491 = vadd.f32 %v455, %v487
        %492 = vrot.lane.b32.xlu0 %v446, 64
        %v493 = vpop.permute.xlu0 %492
        %494 = vrot.lane.b32.xlu0 %v447, 64
        %v495 = vpop.permute.xlu0 %494
        %v498 = vsub.f32 %v402, %v493
        %v499 = vsub.f32 %v404, %v495
        %v500 = vmul.f32 %v498, 1.442695
        %v501 = vpow.pop %v500
        %v502 = vmul.f32 %v499, 1.442695
        %v503 = vpow.pop %v502
        %506 = vrot.lane.b32.xlu0 %v501, 64
        %v507 = vpop.permute.xlu0 %506
        %508 = vrot.lane.b32.xlu0 %v503, 64
        %v509 = vpop.permute.xlu0 %508
        %v512 = vadd.f32 %v478, %v507
        %v513 = vadd.f32 %v479, %v509
        %v514 = vmul.f32 %v501, 0.2857143
        %v515 = vmul.f32 %v503, 0.2857143
        %518 = vrot.lane.b32.xlu0 %v514, 64
        %v519 = vpop.permute.xlu0 %518
        %520 = vrot.lane.b32.xlu0 %v515, 64
        %v521 = vpop.permute.xlu0 %520
        %v524 = vadd.f32 %v490, %v519
        %v525 = vadd.f32 %v491, %v521
        %526 = vrot.lane.b32.xlu0 %v446, 96
        %v527 = vpop.permute.xlu0 %526
        %528 = vrot.lane.b32.xlu0 %v447, 96
        %v529 = vpop.permute.xlu0 %528
        %v532 = vsub.f32 %v402, %v527
        %v533 = vsub.f32 %v404, %v529
        %v534 = vmul.f32 %v532, 1.442695
        %v535 = vpow.pop %v534
        %v536 = vmul.f32 %v533, 1.442695
        %v537 = vpow.pop %v536
        %540 = vrot.lane.b32.xlu0 %v535, 32
        %v541 = vpop.permute.xlu0 %540
        %542 = vrot.lane.b32.xlu0 %v537, 32
        %v543 = vpop.permute.xlu0 %542
        %v546 = vadd.f32 %v512, %v541
        %v547 = vadd.f32 %v513, %v543
        %v548 = vmul.f32 %v535, 0.42857143
        %v549 = vmul.f32 %v537, 0.42857143
        %552 = vrot.lane.b32.xlu0 %v548, 32
        %v553 = vpop.permute.xlu0 %552
        %554 = vrot.lane.b32.xlu0 %v549, 32
        %v555 = vpop.permute.xlu0 %554
        %v558 = vadd.f32 %v524, %v553
        %v559 = vadd.f32 %v525, %v555
        %v560 = vsub.f32 %v403, %v446
        %v561 = vsub.f32 %v405, %v447
        %v562 = vmul.f32 %v560, 1.442695
        %v563 = vpow.pop %v562
        %v564 = vmul.f32 %v561, 1.442695
        %v565 = vpow.pop %v564
        %v566 = vadd.f32 %v546, %v563
        %v567 = vadd.f32 %v547, %v565
        %v568 = vmul.f32 %v563, 0.5714286
        %v569 = vmul.f32 %v565, 0.5714286
        %v570 = vadd.f32 %v558, %v568
        %v571 = vadd.f32 %v559, %v569
        %v572 = vsub.f32 %v403, %v459
        %v573 = vsub.f32 %v405, %v461
        %v574 = vmul.f32 %v572, 1.442695
        %v575 = vpow.pop %v574
        %v576 = vmul.f32 %v573, 1.442695
        %v577 = vpow.pop %v576
        %580 = vrot.lane.b32.xlu0 %v575, 96
        %v581 = vpop.permute.xlu0 %580
        %582 = vrot.lane.b32.xlu0 %v577, 96
        %v583 = vpop.permute.xlu0 %582
        %v586 = vadd.f32 %v566, %v581
        %v587 = vadd.f32 %v567, %v583
        %v588 = vmul.f32 %v575, 0.71428573
        %v589 = vmul.f32 %v577, 0.71428573
        %592 = vrot.lane.b32.xlu0 %v588, 96
        %v593 = vpop.permute.xlu0 %592
        %594 = vrot.lane.b32.xlu0 %v589, 96
        %v595 = vpop.permute.xlu0 %594
        %v598 = vadd.f32 %v570, %v593
        %v599 = vadd.f32 %v571, %v595
        %v600 = vsub.f32 %v403, %v493
        %v601 = vsub.f32 %v405, %v495
        %v602 = vmul.f32 %v600, 1.442695
        %v603 = vpow.pop %v602
        %v604 = vmul.f32 %v601, 1.442695
        %v605 = vpow.pop %v604
        %608 = vrot.lane.b32.xlu0 %v603, 64
        %v609 = vpop.permute.xlu0 %608
        %610 = vrot.lane.b32.xlu0 %v605, 64
        %v611 = vpop.permute.xlu0 %610
        %v614 = vadd.f32 %v586, %v609
        %v615 = vadd.f32 %v587, %v611
        %v616 = vmul.f32 %v603, 0.85714287
        %v617 = vmul.f32 %v605, 0.85714287
        %620 = vrot.lane.b32.xlu0 %v616, 64
        %v621 = vpop.permute.xlu0 %620
        %622 = vrot.lane.b32.xlu0 %v617, 64
        %v623 = vpop.permute.xlu0 %622
        %v626 = vadd.f32 %v598, %v621
        %v627 = vadd.f32 %v599, %v623
        %v628 = vsub.f32 %v403, %v527
        %v629 = vsub.f32 %v405, %v529
        %v630 = vmul.f32 %v628, 1.442695
        %v631 = vpow.pop %v630
        %v632 = vmul.f32 %v629, 1.442695
        %v633 = vpow.pop %v632
        %636 = vrot.lane.b32.xlu0 %v631, 32
        %v637 = vpop.permute.xlu0 %636
        %638 = vrot.lane.b32.xlu0 %v633, 32
        %v639 = vpop.permute.xlu0 %638
        %v642 = vadd.f32 %v614, %v637
        %v643 = vadd.f32 %v615, %v639
        %v644 = vadd.f32 %v626, %v637
        %v645 = vadd.f32 %v627, %v639
        %v646 = vrcp.pop %v642
        %v647 = vrcp.pop %v643
        %v648 = vmul.f32 %v644, %v646
        %v649 = vmul.f32 %v645, %v647
        %650 = vst.msk [vmem:[%s279] sm:$0xff] %vm304, %v648
        %651 = vst.msk [vmem:[%s279 + $0x8] sm:$0xff] %vm304, %v649
        %s652 = smul.u32 2, %s23
        %p653 = scmp.lt.s32.totalorder %s652, 7
        %s654 = scalar_select %p653, %s652, 7
        %s655 = smul.addr %s654, 8
        %s656 = scalar_lea.vmem %s4, %s655
        %s657 = sand.u32 %s151, 1
        %s658 = scalar_lea.sflag [#allocation4], %s657
        %s659 = sand.u32 %s151, 1
        %s660 = smul.addr %s659, 32
        %s661 = scalar_lea.vmem [#allocation5], %s660
        // Predicated region
        $region41: #{tpu_custom_call.1} parent=35 // pred_check
          %p662 = pneg %p135
        $region42: #{tpu_custom_call.1} parent=35 // pred_check_branch
          %664 = sbr.rel (%p662) target = $region44
        $region43: #{tpu_custom_call.1} parent=35 // pred_region
          %s665 = smul.u32 2, %s23
        $region44: #{tpu_custom_call.1} parent=35 // pred_fallthru
          _
        // Predicated region
        $region45: #{tpu_custom_call.1} parent=35 // pred_check
          %p666 = pneg %p161
        $region46: #{tpu_custom_call.1} parent=35 // pred_check_branch
          %668 = sbr.rel (%p666) target = $region48
        $region47: #{tpu_custom_call.1} parent=35 // pred_region
          %s669 = smul.u32 2, %s23
          %s671 = ssub.s32 512, 512
          %672 = vsyncadd %s658, %s671
          %s673 = smul.addr %s669, 2
          %s674 = smul.addr %s673, 128
          %s675 = scalar_lea.hbm %s5, %s674
          %s676 = sshll.u32 %s661, 4
          %s677 = int_to_ptr.vmem [resolvable:$true] %s676
          %682 = dma.vmem_to_hbm [thread:$0]  %s677, 512, %s675, %s658, 256, 256, 16
        $region48: #{tpu_custom_call.1} parent=35 // pred_fallthru
          _
      $region36: #{tpu_custom_call.1} parent=5 // pred_fallthru
        _
      %p683 = scmp.le.s32.totalorder 2, %s18
      // Predicated region
      $region49: #{tpu_custom_call.1} parent=5 // pred_check
        %p684 = pneg %p683
      $region50: #{tpu_custom_call.1} parent=5 // pred_check_branch
        %686 = sbr.rel (%p684) target = $region52
      $region51: #{tpu_custom_call.1} parent=5 // pred_region
        %s687 = ssub.s32 %s18, 2
        // Predicated region
        $region53: #{tpu_custom_call.1} parent=51 // pred_check
          %p688 = pneg %p141
        $region54: #{tpu_custom_call.1} parent=51 // pred_check_branch
          %690 = sbr.rel (%p688) target = $region56
        $region55: #{tpu_custom_call.1} parent=51 // pred_region
          %s691 = smul.u32 2, %s24
          %p692 = scmp.lt.s32.totalorder %s691, 7
          %s693 = scalar_select %p692, %s691, 7
          %s694 = smul.addr %s693, 8
          %s695 = scalar_lea.vmem %s4, %s694
        $region56: #{tpu_custom_call.1} parent=51 // pred_fallthru
          _
        // Predicated region
        $region57: #{tpu_custom_call.1} parent=51 // pred_check
          %p696 = pneg %p167
        $region58: #{tpu_custom_call.1} parent=51 // pred_check_branch
          %698 = sbr.rel (%p696) target = $region60
        $region59: #{tpu_custom_call.1} parent=51 // pred_region
          %s699 = sand.u32 %s152, 1
          %s700 = scalar_lea.sflag [#allocation4], %s699
          %s701 = sand.u32 %s152, 1
          %s702 = smul.addr %s701, 32
          %s703 = scalar_lea.vmem [#allocation5], %s702
          %704 = dma.done %s700, 512
        $region60: #{tpu_custom_call.1} parent=51 // pred_fallthru
          _
      $region52: #{tpu_custom_call.1} parent=5 // pred_fallthru
        _
    $region6: #{tpu_custom_call.1} parent=1 // loop_footer
      %s22 = sadd.s32 1, %s18
    $region7: #{tpu_custom_call.1} parent=1 // loop_footer_branch
      %17 = sbr.rel target = $region3
    $region8: #{tpu_custom_call.1} parent=1 // loop_exit
      _
    %705 = vsyncpa [#allocation3], 1
    %s706 = scalar_lea.sflag [#allocation3], 1
    %707 = vsyncpa %s706, 1
    %708 = vsyncpa [#allocation4], 1
    %s709 = scalar_lea.sflag [#allocation4], 1
    %710 = vsyncpa %s709, 1

</llo_original>
